<compile_context>
chip_gen: v5e
topology: v5e:2x2
jax: 0.10.0
libtpu: 0.0.40
codegen_flags: <defaults>
</compile_context>

<pallas_src>
import functools

import jax
import jax.numpy as jnp
from jax.experimental import pallas as pl
from jax.experimental.pallas import tpu as pltpu


def _round_up(n: int, m: int) -> int:
    return ((n + m - 1) // m) * m


def _cdiv(n: int, m: int) -> int:
    return -(-n // m)


def _pad_to(a, shape):
    pads = [(0, s - d) for d, s in zip(a.shape, shape)]
    if all(p == (0, 0) for p in pads):
        return a
    return jnp.pad(a, pads)


def _dqn_mlp_kernel(x_ref, w1_ref, b1_ref, w2_ref, b2_ref, w3_ref, b3_ref,
                    out_ref):
    # x arrives in f32; cast to bf16 in-kernel (operands bf16, accumulate f32).
    x = x_ref[...].astype(jnp.bfloat16)

    # Layer 1: Linear + bias + ReLU (bias/ReLU in f32 — safe on v5e VPU).
    h = jnp.dot(x, w1_ref[...], preferred_element_type=jnp.float32)
    h = jnp.maximum(h + b1_ref[...], 0.0)

    # Layer 2.
    h = jnp.dot(h.astype(jnp.bfloat16), w2_ref[...],
                preferred_element_type=jnp.float32)
    h = jnp.maximum(h + b2_ref[...], 0.0)

    # Layer 3: Q-values (no activation); narrow (num_actions) output store.
    q = jnp.dot(h.astype(jnp.bfloat16), w3_ref[...],
                preferred_element_type=jnp.float32)
    out_ref[...] = (q + b3_ref[...]).astype(out_ref.dtype)


def prepare_params(params):
    """One-time packing: pad hidden dim to a 128-lane multiple and cast the
    weight matrices to bf16. Keeps this work out of the per-forward path."""
    w1, b1 = params["w1"], params["b1"]
    w2, b2 = params["w2"], params["b2"]
    w3, b3 = params["w3"], params["b3"]
    in_dim, hidden = w1.shape
    num_actions = w3.shape[1]
    hp = _round_up(hidden, 128)
    return {
        "w1": _pad_to(w1, (in_dim, hp)).astype(jnp.bfloat16),
        "b1": _pad_to(b1.reshape(1, -1), (1, hp)).astype(jnp.float32),
        "w2": _pad_to(w2, (hp, hp)).astype(jnp.bfloat16),
        "b2": _pad_to(b2.reshape(1, -1), (1, hp)).astype(jnp.float32),
        "w3": _pad_to(w3, (hp, num_actions)).astype(jnp.bfloat16),
        "b3": b3.reshape(1, -1).astype(jnp.float32),
    }


@functools.partial(jax.jit, static_argnames=("block_batch",))
def dqn_forward(x, prepared, *, block_batch=1024):
    """3-layer Q-network MLP in one batch-tiled, fully-fused Pallas kernel.

    x: (batch, input_dim) float32
    prepared: output of prepare_params() (padded / bf16-cast weights).
    returns: (batch, num_actions) float32
    """
    w1, b1 = prepared["w1"], prepared["b1"]
    w2, b2 = prepared["w2"], prepared["b2"]
    w3, b3 = prepared["w3"], prepared["b3"]

    batch, in_dim = x.shape
    assert w1.shape[0] == in_dim, "x feature dim must match w1"
    hp = w1.shape[1]
    num_actions = w3.shape[1]

    # Even batch split: n_tiles tiles of tb rows each (tb a multiple of 8).
    # Prefer >= 2 tiles whenever the batch permits so both v7x TensorCores get
    # work via the "parallel" grid axis.
    n_tiles = max(1, _cdiv(batch, block_batch))
    if n_tiles < 2 and batch > 8:
        n_tiles = 2
    tb = _round_up(_cdiv(batch, n_tiles), 8)
    bp = tb * n_tiles

    # Pad batch rows only (cheap; zero rows give garbage-but-unread outputs).
    x_p = _pad_to(x, (bp, in_dim))

    # VMEM budget: resident weights (single-buffered) + streamed x/out tiles
    # (double-buffered) + f32 intermediates, with 16 MiB headroom; floor 32 MiB,
    # cap 64 MiB (== v7x per-TC VMEM).
    f32b, bf16b = 4, 2
    weight_bytes = (w1.size + w2.size + w3.size) * bf16b
    bias_bytes = (b1.size + b2.size + b3.size) * f32b
    stream_bytes = 2 * tb * (in_dim * x.dtype.itemsize + num_actions * f32b)
    inter_bytes = 3 * tb * hp * f32b
    vmem_need = weight_bytes + bias_bytes + stream_bytes + inter_bytes
    vmem_limit = int(min(max(vmem_need + 16 * 1024 * 1024, 32 * 1024 * 1024),
                         64 * 1024 * 1024))

    cost = pl.CostEstimate(
        flops=2 * bp * (in_dim * hp + hp * hp + hp * num_actions),
        transcendentals=0,
        bytes_accessed=(bp * in_dim * x.dtype.itemsize + weight_bytes
                        + bias_bytes + bp * num_actions * f32b),
    )

    # Weights/biases: constant block index -> VMEM-resident across all grid
    # steps; single-buffered (double-buffering buys nothing for them).
    def resident(a):
        return pl.BlockSpec(a.shape, lambda i: (0, 0),
                            pipeline_mode=pl.Buffered(1))

    out_p = pl.pallas_call(
        _dqn_mlp_kernel,
        out_shape=jax.ShapeDtypeStruct((bp, num_actions), jnp.float32),
        grid=(n_tiles,),
        in_specs=[
            pl.BlockSpec((tb, in_dim), lambda i: (i, 0)),   # x streamed by batch
            resident(w1), resident(b1),
            resident(w2), resident(b2),
            resident(w3), resident(b3),
        ],
        out_specs=pl.BlockSpec((tb, num_actions), lambda i: (i, 0)),
        compiler_params=pltpu.CompilerParams(
            dimension_semantics=("parallel",),
            vmem_limit_bytes=vmem_limit,
        ),
        cost_estimate=cost,
    )(x_p, w1, b1, w2, b2, w3, b3)

    return out_p if bp == batch else out_p[:batch]


def init_params(key, input_dim, hidden_size, num_actions):
    """Deterministic init matching nn.Linear's U(-1/sqrt(fan_in), 1/sqrt(fan_in))."""
    ks = jax.random.split(key, 6)

    def linear(kw, kb, fan_in, fan_out):
        bound = 1.0 / jnp.sqrt(jnp.float32(fan_in))
        w = jax.random.uniform(kw, (fan_in, fan_out), jnp.float32,
                               minval=-bound, maxval=bound)
        b = jax.random.uniform(kb, (1, fan_out), jnp.float32,
                               minval=-bound, maxval=bound)
        return w, b

    w1, b1 = linear(ks[0], ks[1], input_dim, hidden_size)
    w2, b2 = linear(ks[2], ks[3], hidden_size, hidden_size)
    w3, b3 = linear(ks[4], ks[5], hidden_size, num_actions)
    return {"w1": w1, "b1": b1, "w2": w2, "b2": b2, "w3": w3, "b3": b3}


if __name__ == "__main__":
    # TODO(synk): base_model / state-concat branch not implemented (base_model
    # is an external module); only the base_model=None path is covered.
    key = jax.random.PRNGKey(0)
    kx, kp = jax.random.split(key)

    batch = 2
    input_size = 16     # input_dim (base_model is None)
    hidden_size = 32
    num_actions = 4

    x = jax.random.normal(kx, (batch, input_size), jnp.float32)
    params = init_params(kp, input_size, hidden_size, num_actions)
    prepared = prepare_params(params)   # one-time pad + bf16 cast (hoisted)

    q_values = dqn_forward(x, prepared)
    q_values = jax.block_until_ready(q_values)

    # Reference check in plain f32 JAX (kernel uses bf16 operands + f32
    # accumulation, so allow a small tolerance).
    h = jnp.maximum(x @ params["w1"] + params["b1"], 0.0)
    h = jnp.maximum(h @ params["w2"] + params["b2"], 0.0)
    ref = h @ params["w3"] + params["b3"]
    assert q_values.shape == (batch, num_actions)
    assert jnp.allclose(q_values, ref, atol=2e-2, rtol=2e-2), \
        "mismatch vs reference"

    print("KERNEL_OK")
</pallas_src>

<mosaic_0001>
module attributes {stable_mosaic.version = 11 : i64} {
  func.func @_dqn_mlp_kernel(%arg0: i32, %arg1: memref<8x16xf32, #tpu.memory_space<vmem>>, %arg2: memref<16x128xbf16, #tpu.memory_space<vmem>>, %arg3: memref<1x128xf32, #tpu.memory_space<vmem>>, %arg4: memref<128x128xbf16, #tpu.memory_space<vmem>>, %arg5: memref<1x128xf32, #tpu.memory_space<vmem>>, %arg6: memref<128x4xbf16, #tpu.memory_space<vmem>>, %arg7: memref<1x4xf32, #tpu.memory_space<vmem>>, %arg8: memref<8x4xf32, #tpu.memory_space<vmem>>) attributes {dimension_semantics = [#tpu.dimension_semantics<parallel>], iteration_bounds = array<i64: 1>, scalar_prefetch = 0 : i64, scratch_operands = 0 : i64, tpu.core_type = #tpu.core_type<tc>, window_params = [{transform_indices = @transform_0, window_bounds = array<i64: 8, 16>}, {pipeline_mode = #tpu.pipeline_mode<synchronous>, transform_indices = @transform_1, window_bounds = array<i64: 16, 128>}, {pipeline_mode = #tpu.pipeline_mode<synchronous>, transform_indices = @transform_2, window_bounds = array<i64: 1, 128>}, {pipeline_mode = #tpu.pipeline_mode<synchronous>, transform_indices = @transform_3, window_bounds = array<i64: 128, 128>}, {pipeline_mode = #tpu.pipeline_mode<synchronous>, transform_indices = @transform_4, window_bounds = array<i64: 1, 128>}, {pipeline_mode = #tpu.pipeline_mode<synchronous>, transform_indices = @transform_5, window_bounds = array<i64: 128, 4>}, {pipeline_mode = #tpu.pipeline_mode<synchronous>, transform_indices = @transform_6, window_bounds = array<i64: 1, 4>}, {transform_indices = @transform_7, window_bounds = array<i64: 8, 4>}]} {
    %c0 = arith.constant 0 : index
    %c0_0 = arith.constant 0 : index
    %0 = vector.load %arg1[%c0, %c0_0] : memref<8x16xf32, #tpu.memory_space<vmem>>, vector<8x16xf32>
    %1 = arith.truncf %0 : vector<8x16xf32> to vector<8x16xbf16>
    %c0_1 = arith.constant 0 : index
    %c0_2 = arith.constant 0 : index
    %2 = vector.load %arg2[%c0_1, %c0_2] : memref<16x128xbf16, #tpu.memory_space<vmem>>, vector<16x128xbf16>
    %cst = arith.constant dense<0.000000e+00> : vector<8x128xf32>
    %3 = tpu.matmul %1, %2, %cst {dimension_numbers = #tpu.dot_dimension_numbers<[1], [0], [0], [1], [0, 0, 1, 1], [], []>} : vector<8x16xbf16>, vector<16x128xbf16>, vector<8x128xf32> -> vector<8x128xf32>
    %c0_3 = arith.constant 0 : index
    %c0_4 = arith.constant 0 : index
    %4 = vector.load %arg3[%c0_3, %c0_4] : memref<1x128xf32, #tpu.memory_space<vmem>>, vector<1x128xf32>
    %5 = vector.broadcast %4 : vector<1x128xf32> to vector<8x128xf32>
    %6 = arith.addf %3, %5 : vector<8x128xf32>
    %cst_5 = arith.constant 0.000000e+00 : f32
    %7 = vector.broadcast %cst_5 : f32 to vector<8x128xf32>
    %8 = arith.maximumf %6, %7 : vector<8x128xf32>
    %9 = arith.truncf %8 : vector<8x128xf32> to vector<8x128xbf16>
    %c0_6 = arith.constant 0 : index
    %c0_7 = arith.constant 0 : index
    %10 = vector.load %arg4[%c0_6, %c0_7] : memref<128x128xbf16, #tpu.memory_space<vmem>>, vector<128x128xbf16>
    %cst_8 = arith.constant dense<0.000000e+00> : vector<8x128xf32>
    %11 = tpu.matmul %9, %10, %cst_8 {dimension_numbers = #tpu.dot_dimension_numbers<[1], [0], [0], [1], [0, 0, 1, 1], [], []>} : vector<8x128xbf16>, vector<128x128xbf16>, vector<8x128xf32> -> vector<8x128xf32>
    %c0_9 = arith.constant 0 : index
    %c0_10 = arith.constant 0 : index
    %12 = vector.load %arg5[%c0_9, %c0_10] : memref<1x128xf32, #tpu.memory_space<vmem>>, vector<1x128xf32>
    %13 = vector.broadcast %12 : vector<1x128xf32> to vector<8x128xf32>
    %14 = arith.addf %11, %13 : vector<8x128xf32>
    %cst_11 = arith.constant 0.000000e+00 : f32
    %15 = vector.broadcast %cst_11 : f32 to vector<8x128xf32>
    %16 = arith.maximumf %14, %15 : vector<8x128xf32>
    %17 = arith.truncf %16 : vector<8x128xf32> to vector<8x128xbf16>
    %c0_12 = arith.constant 0 : index
    %c0_13 = arith.constant 0 : index
    %18 = vector.load %arg6[%c0_12, %c0_13] : memref<128x4xbf16, #tpu.memory_space<vmem>>, vector<128x4xbf16>
    %cst_14 = arith.constant dense<0.000000e+00> : vector<8x4xf32>
    %19 = tpu.matmul %17, %18, %cst_14 {dimension_numbers = #tpu.dot_dimension_numbers<[1], [0], [0], [1], [0, 0, 1, 1], [], []>} : vector<8x128xbf16>, vector<128x4xbf16>, vector<8x4xf32> -> vector<8x4xf32>
    %c0_15 = arith.constant 0 : index
    %c0_16 = arith.constant 0 : index
    %20 = vector.load %arg7[%c0_15, %c0_16] : memref<1x4xf32, #tpu.memory_space<vmem>>, vector<1x4xf32>
    %21 = vector.broadcast %20 : vector<1x4xf32> to vector<8x4xf32>
    %22 = arith.addf %19, %21 : vector<8x4xf32>
    %c0_17 = arith.constant 0 : index
    %c0_18 = arith.constant 0 : index
    %23 = vector.load %arg8[%c0_17, %c0_18] : memref<8x4xf32, #tpu.memory_space<vmem>>, vector<8x4xf32>
    tpu.vector_store %arg8[%c0_17, %c0_18], %22 {strides = array<i32>} : memref<8x4xf32, #tpu.memory_space<vmem>>, vector<8x4xf32>,
    return
  }
  func.func @transform_0(%arg0: i32) -> (i32, i32) {
    %c0_i32 = arith.constant 0 : i32
    %c0_i32_0 = arith.constant 0 : i32
    return %arg0, %c0_i32 : i32, i32
  }
  func.func @transform_1(%arg0: i32) -> (i32, i32) {
    %c0_i32 = arith.constant 0 : i32
    %c0_i32_0 = arith.constant 0 : i32
    %c0_i32_1 = arith.constant 0 : i32
    return %c0_i32, %c0_i32_0 : i32, i32
  }
  func.func @transform_2(%arg0: i32) -> (i32, i32) {
    %c0_i32 = arith.constant 0 : i32
    %c0_i32_0 = arith.constant 0 : i32
    %c0_i32_1 = arith.constant 0 : i32
    return %c0_i32, %c0_i32_0 : i32, i32
  }
  func.func @transform_3(%arg0: i32) -> (i32, i32) {
    %c0_i32 = arith.constant 0 : i32
    %c0_i32_0 = arith.constant 0 : i32
    %c0_i32_1 = arith.constant 0 : i32
    return %c0_i32, %c0_i32_0 : i32, i32
  }
  func.func @transform_4(%arg0: i32) -> (i32, i32) {
    %c0_i32 = arith.constant 0 : i32
    %c0_i32_0 = arith.constant 0 : i32
    %c0_i32_1 = arith.constant 0 : i32
    return %c0_i32, %c0_i32_0 : i32, i32
  }
  func.func @transform_5(%arg0: i32) -> (i32, i32) {
    %c0_i32 = arith.constant 0 : i32
    %c0_i32_0 = arith.constant 0 : i32
    %c0_i32_1 = arith.constant 0 : i32
    return %c0_i32, %c0_i32_0 : i32, i32
  }
  func.func @transform_6(%arg0: i32) -> (i32, i32) {
    %c0_i32 = arith.constant 0 : i32
    %c0_i32_0 = arith.constant 0 : i32
    %c0_i32_1 = arith.constant 0 : i32
    return %c0_i32, %c0_i32_0 : i32, i32
  }
  func.func @transform_7(%arg0: i32) -> (i32, i32) {
    %c0_i32 = arith.constant 0 : i32
    %c0_i32_0 = arith.constant 0 : i32
    return %arg0, %c0_i32 : i32, i32
  }
}

</mosaic_0001>

<llo_original>
// kernel: dqn_forward.1
$region0: #{dqn_forward.1}
  #allocation0 [shape = 'u32[]', space=smem, size = 0x4, offset = 0x4, fixed_abs, tag = 'smem constant byte address 0x4 - core index']
  #allocation1 [shape = 'u32[72,128]{1,0:T(1,128)}', space=vmem, size = 0x9000, scoped, tag = 'internal scratch']
  %s0 = inlined_call_operand.vmem [shape: f32[8,16], index: 0, kind: input, shape index: {}]
  %s1 = inlined_call_operand.vmem [shape: bf16[16,128], index: 1, kind: input, shape index: {}]
  %s2 = inlined_call_operand.vmem [shape: f32[1,128], index: 2, kind: input, shape index: {}]
  %s3 = inlined_call_operand.vmem [shape: bf16[128,128], index: 3, kind: input, shape index: {}]
  %s4 = inlined_call_operand.vmem [shape: f32[1,128], index: 4, kind: input, shape index: {}]
  %s5 = inlined_call_operand.vmem [shape: bf16[128,4], index: 5, kind: input, shape index: {}]
  %s6 = inlined_call_operand.vmem [shape: f32[1,4], index: 6, kind: input, shape index: {}]
  %s7 = inlined_call_operand.vmem [shape: f32[8,4], index: 7, kind: output, shape index: {}]
  %s8 = sld [smem:[#allocation0]]
  $region38: #{dqn_forward.1} parent=0
    _
  %s10 = ssub.s32 1, %s8
  %s11 = scalar_select 0, %s10, %s8
  // Predicated region
  $region2: #{dqn_forward.1} parent=0 // pred_check
    _
  $region3: #{dqn_forward.1} parent=0 // pred_check_branch
    %13 = sbr.rel (0) target = $region5
  $region4: #{dqn_forward.1} parent=0 // pred_region
    _
  $region5: #{dqn_forward.1} parent=0 // pred_fallthru
    _
  // Predicated region
  $region6: #{dqn_forward.1} parent=0 // pred_check
    _
  $region7: #{dqn_forward.1} parent=0 // pred_check_branch
    %15 = sbr.rel (0) target = $region9
  $region8: #{dqn_forward.1} parent=0 // pred_region
    _
  $region9: #{dqn_forward.1} parent=0 // pred_fallthru
    _
  // Predicated region
  $region10: #{dqn_forward.1} parent=0 // pred_check
    _
  $region11: #{dqn_forward.1} parent=0 // pred_check_branch
    %17 = sbr.rel (0) target = $region13
  $region12: #{dqn_forward.1} parent=0 // pred_region
    _
  $region13: #{dqn_forward.1} parent=0 // pred_fallthru
    _
  // Predicated region
  $region14: #{dqn_forward.1} parent=0 // pred_check
    _
  $region15: #{dqn_forward.1} parent=0 // pred_check_branch
    %19 = sbr.rel (0) target = $region17
  $region16: #{dqn_forward.1} parent=0 // pred_region
    _
  $region17: #{dqn_forward.1} parent=0 // pred_fallthru
    _
  // Predicated region
  $region18: #{dqn_forward.1} parent=0 // pred_check
    _
  $region19: #{dqn_forward.1} parent=0 // pred_check_branch
    %21 = sbr.rel (0) target = $region21
  $region20: #{dqn_forward.1} parent=0 // pred_region
    _
  $region21: #{dqn_forward.1} parent=0 // pred_fallthru
    _
  // Predicated region
  $region22: #{dqn_forward.1} parent=0 // pred_check
    _
  $region23: #{dqn_forward.1} parent=0 // pred_check_branch
    %23 = sbr.rel (0) target = $region25
  $region24: #{dqn_forward.1} parent=0 // pred_region
    _
  $region25: #{dqn_forward.1} parent=0 // pred_fallthru
    _
  // Predicated region
  $region26: #{dqn_forward.1} parent=0 // pred_check
    _
  $region27: #{dqn_forward.1} parent=0 // pred_check_branch
    %25 = sbr.rel (0) target = $region29
  $region28: #{dqn_forward.1} parent=0 // pred_region
    _
  $region29: #{dqn_forward.1} parent=0 // pred_fallthru
    _
  %v27 = vld [vmem:[%s0] sm:$0xff]
  %v28 = vpack.c.bf16 %v27, %v27
  %v29 = vld [vmem:[%s1] sm:$0xf]
  %v30 = vld [vmem:[%s1 + $0x4] sm:$0xf]
  %v31 = vld [vmem:[%s2] sm:$0x1]
  %v33 = vperm.slane %v31, 0
  %v37 = vunpack.c.l.b16 %v29
  %v38 = vunpack.c.l.b16 %v30
  %v39 = vpack.c.b16 %v38, %v37
  %vm41 = vcmask 130048
  %v43 = vsel %vm41, %v28, 0
  %45 = vmatpush.bf16.msra.mxu0 0
  %46 = vmatpush.bf16.msra.mxu0 0
  %47 = vmatpush.bf16.msra.mxu0 0
  %48 = vmatpush.bf16.msra.mxu0 0
  %49 = vmatpush.bf16.msra.mxu0 0
  %50 = vmatpush.bf16.msra.mxu0 0
  %51 = vmatpush.bf16.msra.mxu0 0
  %52 = vmatpush.bf16.msra.mxu0 %v39
  %53 = vmatmul.bf16.gmra.mxu0 %v43
  %v54 = vpop.f32.mrf.mxu0
  %v55 = vadd.f32 %v33, %v54
  %v56 = vpop.f32.mrf.mxu0
  %57 = vdwg.mxu0
  %v58 = vmax.f32 %v55, 0.0
  %v59 = vpack.c.bf16 %v58, %v58
  %v60 = vld [vmem:[%s3] sm:$0xf]
  %v61 = vld [vmem:[%s3 + $0x4] sm:$0xf]
  %v62 = vld [vmem:[%s3 + $0x8] sm:$0xf]
  %v63 = vld [vmem:[%s3 + $0xc] sm:$0xf]
  %v64 = vld [vmem:[%s3 + $0x10] sm:$0xf]
  %v65 = vld [vmem:[%s3 + $0x14] sm:$0xf]
  %v66 = vld [vmem:[%s3 + $0x18] sm:$0xf]
  %v67 = vld [vmem:[%s3 + $0x1c] sm:$0xf]
  %v68 = vld [vmem:[%s3 + $0x20] sm:$0xf]
  %v69 = vld [vmem:[%s3 + $0x24] sm:$0xf]
  %v70 = vld [vmem:[%s3 + $0x28] sm:$0xf]
  %v71 = vld [vmem:[%s3 + $0x2c] sm:$0xf]
  %v72 = vld [vmem:[%s3 + $0x30] sm:$0xf]
  %v73 = vld [vmem:[%s3 + $0x34] sm:$0xf]
  %v74 = vld [vmem:[%s3 + $0x38] sm:$0xf]
  %v75 = vld [vmem:[%s3 + $0x3c] sm:$0xf]
  %v76 = vld [vmem:[%s4] sm:$0x1]
  %v78 = vperm.slane %v76, 0
  %v96 = vunpack.c.l.b16 %v60
  %v97 = vunpack.c.l.b16 %v61
  %v98 = vunpack.c.l.b16 %v62
  %v99 = vunpack.c.l.b16 %v63
  %v100 = vunpack.c.l.b16 %v64
  %v101 = vunpack.c.l.b16 %v65
  %v102 = vunpack.c.l.b16 %v66
  %v103 = vunpack.c.l.b16 %v67
  %v104 = vunpack.c.l.b16 %v68
  %v105 = vunpack.c.l.b16 %v69
  %v106 = vunpack.c.l.b16 %v70
  %v107 = vunpack.c.l.b16 %v71
  %v108 = vunpack.c.l.b16 %v72
  %v109 = vunpack.c.l.b16 %v73
  %v110 = vunpack.c.l.b16 %v74
  %v111 = vunpack.c.l.b16 %v75
  %v112 = vpack.c.b16 %v97, %v96
  %v113 = vpack.c.b16 %v99, %v98
  %v114 = vpack.c.b16 %v101, %v100
  %v115 = vpack.c.b16 %v103, %v102
  %v116 = vpack.c.b16 %v105, %v104
  %v117 = vpack.c.b16 %v107, %v106
  %v118 = vpack.c.b16 %v109, %v108
  %v119 = vpack.c.b16 %v111, %v110
  %128 = vmatpush.bf16.msra.mxu0 %v119
  %129 = vmatpush.bf16.msra.mxu0 %v118
  %130 = vmatpush.bf16.msra.mxu0 %v117
  %131 = vmatpush.bf16.msra.mxu0 %v116
  %132 = vmatpush.bf16.msra.mxu0 %v115
  %133 = vmatpush.bf16.msra.mxu0 %v114
  %134 = vmatpush.bf16.msra.mxu0 %v113
  %135 = vmatpush.bf16.msra.mxu0 %v112
  %136 = vmatmul.bf16.gmra.mxu0 %v59
  %v137 = vpop.f32.mrf.mxu0
  %v138 = vadd.f32 %v78, %v137
  %v139 = vpop.f32.mrf.mxu0
  %140 = vdwg.mxu0
  %v141 = vmax.f32 %v138, 0.0
  %v142 = vpack.c.bf16 %v141, %v141
  %v143 = vld [vmem:[%s5] sm:$0xf]
  %v144 = vld [vmem:[%s5 + $0x4] sm:$0xf]
  %v145 = vld [vmem:[%s5 + $0x8] sm:$0xf]
  %v146 = vld [vmem:[%s5 + $0xc] sm:$0xf]
  %v147 = vld [vmem:[%s5 + $0x10] sm:$0xf]
  %v148 = vld [vmem:[%s5 + $0x14] sm:$0xf]
  %v149 = vld [vmem:[%s5 + $0x18] sm:$0xf]
  %v150 = vld [vmem:[%s5 + $0x1c] sm:$0xf]
  %v151 = vld [vmem:[%s5 + $0x20] sm:$0xf]
  %v152 = vld [vmem:[%s5 + $0x24] sm:$0xf]
  %v153 = vld [vmem:[%s5 + $0x28] sm:$0xf]
  %v154 = vld [vmem:[%s5 + $0x2c] sm:$0xf]
  %v155 = vld [vmem:[%s5 + $0x30] sm:$0xf]
  %v156 = vld [vmem:[%s5 + $0x34] sm:$0xf]
  %v157 = vld [vmem:[%s5 + $0x38] sm:$0xf]
  %v158 = vld [vmem:[%s5 + $0x3c] sm:$0xf]
  %v159 = vld [vmem:[%s6] sm:$0x1]
  %v161 = vperm.slane %v159, 0
  %v179 = vunpack.c.l.b16 %v143
  %v180 = vunpack.c.l.b16 %v144
  %v181 = vunpack.c.l.b16 %v145
  %v182 = vunpack.c.l.b16 %v146
  %v183 = vunpack.c.l.b16 %v147
  %v184 = vunpack.c.l.b16 %v148
  %v185 = vunpack.c.l.b16 %v149
  %v186 = vunpack.c.l.b16 %v150
  %v187 = vunpack.c.l.b16 %v151
  %v188 = vunpack.c.l.b16 %v152
  %v189 = vunpack.c.l.b16 %v153
  %v190 = vunpack.c.l.b16 %v154
  %v191 = vunpack.c.l.b16 %v155
  %v192 = vunpack.c.l.b16 %v156
  %v193 = vunpack.c.l.b16 %v157
  %v194 = vunpack.c.l.b16 %v158
  %v195 = vpack.c.b16 %v180, %v179
  %v196 = vpack.c.b16 %v182, %v181
  %v197 = vpack.c.b16 %v184, %v183
  %v198 = vpack.c.b16 %v186, %v185
  %v199 = vpack.c.b16 %v188, %v187
  %v200 = vpack.c.b16 %v190, %v189
  %v201 = vpack.c.b16 %v192, %v191
  %v202 = vpack.c.b16 %v194, %v193
  %211 = vmatpush.bf16.msra.mxu0 %v202
  %212 = vmatpush.bf16.msra.mxu0 %v201
  %213 = vmatpush.bf16.msra.mxu0 %v200
  %214 = vmatpush.bf16.msra.mxu0 %v199
  %215 = vmatpush.bf16.msra.mxu0 %v198
  %216 = vmatpush.bf16.msra.mxu0 %v197
  %217 = vmatpush.bf16.msra.mxu0 %v196
  %218 = vmatpush.bf16.msra.mxu0 %v195
  %219 = vmatmul.bf16.gmra.mxu0 %v142
  %v220 = vpop.f32.mrf.mxu0
  %v221 = vadd.f32 %v161, %v220
  %v222 = vpop.f32.mrf.mxu0
  %223 = vdwg.mxu0
  %vm224 = vcmask 31744
  %225 = vst.msk [vmem:[%s7] sm:$0xff] %vm224, %v221
  // Predicated region
  $region30: #{dqn_forward.1} parent=0 // pred_check
    _
  $region31: #{dqn_forward.1} parent=0 // pred_check_branch
    %227 = sbr.rel (0) target = $region33
  $region32: #{dqn_forward.1} parent=0 // pred_region
    _
  $region33: #{dqn_forward.1} parent=0 // pred_fallthru
    _
  // Predicated region
  $region34: #{dqn_forward.1} parent=0 // pred_check
    _
  $region35: #{dqn_forward.1} parent=0 // pred_check_branch
    %229 = sbr.rel (0) target = $region37
  $region36: #{dqn_forward.1} parent=0 // pred_region
    _
  $region37: #{dqn_forward.1} parent=0 // pred_fallthru
    _

</llo_original>
